<compile_context>
chip_gen: v5e
topology: v5e:2x2
jax: 0.10.0
libtpu: 0.0.40
codegen_flags: <defaults>
</compile_context>

<pallas_src>
import functools

import numpy as np
import jax
import jax.numpy as jnp
from jax import lax
from jax.experimental import pallas as pl
from jax.experimental.pallas import tpu as pltpu

NEG_SLOPE = 0.01  # F.leaky_relu default negative_slope


def gat_fused_kernel(h_ref, wbig_ref, d0_ref, d1_ref, src1h_ref, dst1h_ref,
                     dst1h_t_ref, rexp_ref, out_ref, *, num_heads, out_dim):
    H, F = num_heads, out_dim
    HF = H * F

    # ---- single fused node-level projection -------------------------------
    # W_big columns: [ z (HF) | zr (HF) | s0 (H) | s0r (H) | s1 (H) | s1r (H) ]
    # with s0 = z@a_src, s1 = z@a_dst, s0r = zr@a_src, s1r = zr@a_dst folded
    # into the projection (attn_fc is applied to BOTH z and zr, matching the
    # reference module where attn_fcr is initialized but unused).
    ZZ = jnp.dot(h_ref[...], wbig_ref[...],
                 preferred_element_type=jnp.float32)            # [N, 2HF+4H]

    S = src1h_ref[...].astype(jnp.float32)      # [E, N] one-hot(src)
    D = dst1h_ref[...].astype(jnp.float32)      # [E, N] one-hot(dst)
    Dt = dst1h_t_ref[...].astype(jnp.float32)   # [N, E] one-hot(dst)^T

    # ---- per-edge gathers (one-hot matmuls on the MXU) ---------------------
    G = jnp.dot(S, ZZ[:, :2 * HF + 2 * H],
                preferred_element_type=jnp.float32)             # [E, 2HF+2H]
    Gd = jnp.dot(D, ZZ[:, 2 * HF + 2 * H:],
                 preferred_element_type=jnp.float32)            # [E, 2H]

    z_src = G[:, :HF]                     # [E, HF]
    zr_src = G[:, HF:2 * HF]              # [E, HF]
    s0_src = G[:, 2 * HF:2 * HF + H]      # [E, H]
    s0r_src = G[:, 2 * HF + H:]           # [E, H]
    s1_dst = Gd[:, :H]                    # [E, H]
    s1r_dst = Gd[:, H:]                   # [E, H]

    # ---- edge attention (leaky relu) + direction-weighted message ----------
    a = s0_src + s1_dst
    ar = s0r_src + s1r_dst
    e = jnp.where(a > 0, a, NEG_SLOPE * a)
    er = jnp.where(ar > 0, ar, NEG_SLOPE * ar)

    d0 = d0_ref[...]                      # [E, 1]
    d1 = d1_ref[...]                      # [E, 1]
    e_msg = d0 * e + d1 * er              # [E, H]
    q = d0 * z_src + d1 * zr_src          # [E, HF]

    # ---- per-destination softmax + weighted scatter-sum --------------------
    # softmax is shift-invariant; a per-head global max keeps exp() stable and
    # avoids building a per-head [E, N] masked-score matrix.
    m = jnp.max(e_msg, axis=0, keepdims=True)                   # [1, H]
    w = jnp.exp(e_msg - m)                                      # [E, H]
    wexp = jnp.dot(w, rexp_ref[...],
                   preferred_element_type=jnp.float32)          # [E, HF]
    packed = jnp.concatenate([wexp * q, wexp], axis=1)          # [E, 2HF]
    red = jnp.dot(Dt, packed, preferred_element_type=jnp.float32)  # [N, 2HF]
    numer = red[:, :HF]
    denom = red[:, HF:]
    # zero-in-degree nodes get a zero row (as DGL's update_all zero-fills);
    # the guard avoids 0/0 -> NaN.
    inv = pl.reciprocal(jnp.where(denom > 0, denom, 1.0), approx=False)
    out_ref[...] = numer * inv


def multi_head_gat(h, wfc, wfcr, wattn, src, dst, direction):
    """h: [N, in_dim]; wfc/wfcr: [H, out_dim, in_dim]; wattn: [H, 1, 2*out_dim];
    src/dst: [E] int32 edge endpoints; direction: [E, 2] float32.
    Returns [N, H*out_dim] (torch.cat(head_outs, dim=1) layout)."""
    H, F, Din = wfc.shape
    N = h.shape[0]
    E = src.shape[0]
    HF = H * F

    wfc_t = jnp.transpose(wfc, (0, 2, 1)).astype(jnp.float32)    # [H, Din, F]
    wfcr_t = jnp.transpose(wfcr, (0, 2, 1)).astype(jnp.float32)  # [H, Din, F]
    a_src = wattn[:, 0, :F].astype(jnp.float32)                  # [H, F]
    a_dst = wattn[:, 0, F:].astype(jnp.float32)                  # [H, F]

    # Fused weight: node projection + attention columns for all heads.
    z_cols = jnp.transpose(wfc_t, (1, 0, 2)).reshape(Din, HF)    # head-major
    zr_cols = jnp.transpose(wfcr_t, (1, 0, 2)).reshape(Din, HF)
    s0_cols = jnp.einsum('hdf,hf->dh', wfc_t, a_src)             # [Din, H]
    s0r_cols = jnp.einsum('hdf,hf->dh', wfcr_t, a_src)  # attn_fc reused on zr
    s1_cols = jnp.einsum('hdf,hf->dh', wfc_t, a_dst)
    s1r_cols = jnp.einsum('hdf,hf->dh', wfcr_t, a_dst)
    w_big = jnp.concatenate(
        [z_cols, zr_cols, s0_cols, s0r_cols, s1_cols, s1r_cols], axis=1)
    wcols = 2 * HF + 4 * H

    # One-hot gather/scatter matrices; 0/1 is exact in bf16 -> half the bytes.
    src1h = jax.nn.one_hot(src, N, dtype=jnp.bfloat16)           # [E, N]
    dst1h = jax.nn.one_hot(dst, N, dtype=jnp.bfloat16)           # [E, N]
    dst1h_t = dst1h.T                                            # [N, E]

    # Head-expansion matrix: kron(I_H, ones(1,F)); broadcasts per-head scalars
    # to their F-wide lane block via a tiny MXU matmul.
    rexp = jnp.kron(jnp.eye(H, dtype=jnp.float32),
                    jnp.ones((1, F), jnp.float32))               # [H, HF]

    d0 = direction[:, 0:1].astype(jnp.float32)                   # [E, 1]
    d1 = direction[:, 1:2].astype(jnp.float32)                   # [E, 1]

    kernel = functools.partial(gat_fused_kernel, num_heads=H, out_dim=F)
    out = pl.pallas_call(
        kernel,
        out_shape=jax.ShapeDtypeStruct((N, HF), jnp.float32),
        grid=(1,),
        in_specs=[
            pl.BlockSpec((N, Din), lambda i: (0, 0)),       # h
            pl.BlockSpec((Din, wcols), lambda i: (0, 0)),   # fused weights
            pl.BlockSpec((E, 1), lambda i: (0, 0)),         # d0
            pl.BlockSpec((E, 1), lambda i: (0, 0)),         # d1
            pl.BlockSpec((E, N), lambda i: (0, 0)),         # src one-hot
            pl.BlockSpec((E, N), lambda i: (0, 0)),         # dst one-hot
            pl.BlockSpec((N, E), lambda i: (0, 0)),         # dst one-hot^T
            pl.BlockSpec((H, HF), lambda i: (0, 0)),        # head expansion
        ],
        out_specs=pl.BlockSpec((N, HF), lambda i: (0, 0)),
        compiler_params=pltpu.CompilerParams(
            dimension_semantics=("arbitrary",),
            vmem_limit_bytes=32 * 1024 * 1024),
    )(h.astype(jnp.float32), w_big, d0, d1, src1h, dst1h, dst1h_t, rexp)
    return out


def reference_multi_head_gat(h, wfc, wfcr, wattn, src, dst, direction):
    """Pure NumPy reference emulating the DGL message-passing semantics."""
    H, out_dim, _ = wfc.shape
    N = h.shape[0]
    outs = []
    for hd in range(H):
        z = h @ wfc[hd].T
        zr = h @ wfcr[hd].T
        z_src, z_dst = z[src], z[dst]
        zr_src, zr_dst = zr[src], zr[dst]
        a = np.concatenate([z_src, z_dst], axis=1) @ wattn[hd].T   # [E,1]
        ar = np.concatenate([zr_src, zr_dst], axis=1) @ wattn[hd].T
        e = np.where(a > 0, a, NEG_SLOPE * a)
        er = np.where(ar > 0, ar, NEG_SLOPE * ar)
        d0, d1 = direction[:, 0:1], direction[:, 1:2]
        q = d0 * z_src + d1 * zr_src
        em = (d0 * e + d1 * er)[:, 0]
        h_out = np.zeros((N, out_dim), dtype=np.float32)
        for n in range(N):
            idx = np.where(dst == n)[0]
            s = em[idx]
            s = s - s.max()
            p = np.exp(s)
            alpha = p / p.sum()
            h_out[n] = (alpha[:, None] * q[idx]).sum(0)
        outs.append(h_out)
    return np.concatenate(outs, axis=1)


if __name__ == "__main__":
    N, in_dim, out_dim, H = 8, 16, 32, 4

    # ring-style graph: node i -> (i+1)%N and (i+2)%N, so every node has
    # exactly 2 in-edges (softmax in reduce_func is well-defined).
    src_np = np.concatenate([np.arange(N), np.arange(N)]).astype(np.int32)
    dst_np = np.concatenate([(np.arange(N) + 1) % N,
                             (np.arange(N) + 2) % N]).astype(np.int32)
    E = src_np.shape[0]

    key = jax.random.PRNGKey(0)
    keys = jax.random.split(key, 6)

    # xavier_normal_ with gain = calculate_gain('relu') = sqrt(2)
    gain = float(np.sqrt(2.0))
    std_fc = gain * np.sqrt(2.0 / (in_dim + out_dim))
    std_attn = gain * np.sqrt(2.0 / (2 * out_dim + 1))

    h = jax.random.normal(keys[0], (N, in_dim), dtype=jnp.float32)
    wfc = jax.random.normal(keys[1], (H, out_dim, in_dim), dtype=jnp.float32) * std_fc
    wfcr = jax.random.normal(keys[2], (H, out_dim, in_dim), dtype=jnp.float32) * std_fc
    wattn = jax.random.normal(keys[3], (H, 1, 2 * out_dim), dtype=jnp.float32) * std_attn
    # attn_fcr exists in the module's __init__ but is never used in forward.
    wattnr = jax.random.normal(keys[4], (H, 1, 2 * out_dim), dtype=jnp.float32) * std_attn
    direction = jax.random.uniform(keys[5], (E, 2), dtype=jnp.float32)

    out = multi_head_gat(h, wfc, wfcr, wattn,
                         jnp.asarray(src_np), jnp.asarray(dst_np), direction)
    out = jax.block_until_ready(out)
    assert out.shape == (N, H * out_dim)

    ref = reference_multi_head_gat(np.asarray(h), np.asarray(wfc),
                                   np.asarray(wfcr), np.asarray(wattn),
                                   src_np, dst_np, np.asarray(direction))
    np.testing.assert_allclose(np.asarray(out), ref, rtol=1e-4, atol=1e-4)
    print("KERNEL_OK")
</pallas_src>

<mosaic_0001>
module attributes {stable_mosaic.version = 11 : i64} {
  func.func @gat_fused_kernel(%arg0: i32, %arg1: memref<8x16xf32, #tpu.memory_space<vmem>>, %arg2: memref<16x272xf32, #tpu.memory_space<vmem>>, %arg3: memref<16x1xf32, #tpu.memory_space<vmem>>, %arg4: memref<16x1xf32, #tpu.memory_space<vmem>>, %arg5: memref<16x8xbf16, #tpu.memory_space<vmem>>, %arg6: memref<16x8xbf16, #tpu.memory_space<vmem>>, %arg7: memref<8x16xbf16, #tpu.memory_space<vmem>>, %arg8: memref<4x128xf32, #tpu.memory_space<vmem>>, %arg9: memref<8x128xf32, #tpu.memory_space<vmem>>) attributes {dimension_semantics = [#tpu.dimension_semantics<arbitrary>], iteration_bounds = array<i64: 1>, scalar_prefetch = 0 : i64, scratch_operands = 0 : i64, tpu.core_type = #tpu.core_type<tc>, window_params = [{pipeline_mode = #tpu.pipeline_mode<synchronous>, transform_indices = @transform_0, window_bounds = array<i64: 8, 16>}, {pipeline_mode = #tpu.pipeline_mode<synchronous>, transform_indices = @transform_1, window_bounds = array<i64: 16, 272>}, {pipeline_mode = #tpu.pipeline_mode<synchronous>, transform_indices = @transform_2, window_bounds = array<i64: 16, 1>}, {pipeline_mode = #tpu.pipeline_mode<synchronous>, transform_indices = @transform_3, window_bounds = array<i64: 16, 1>}, {pipeline_mode = #tpu.pipeline_mode<synchronous>, transform_indices = @transform_4, window_bounds = array<i64: 16, 8>}, {pipeline_mode = #tpu.pipeline_mode<synchronous>, transform_indices = @transform_5, window_bounds = array<i64: 16, 8>}, {pipeline_mode = #tpu.pipeline_mode<synchronous>, transform_indices = @transform_6, window_bounds = array<i64: 8, 16>}, {pipeline_mode = #tpu.pipeline_mode<synchronous>, transform_indices = @transform_7, window_bounds = array<i64: 4, 128>}, {pipeline_mode = #tpu.pipeline_mode<synchronous>, transform_indices = @transform_8, window_bounds = array<i64: 8, 128>}]} {
    %c0 = arith.constant 0 : index
    %c0_0 = arith.constant 0 : index
    %0 = vector.load %arg1[%c0, %c0_0] : memref<8x16xf32, #tpu.memory_space<vmem>>, vector<8x16xf32>
    %c0_1 = arith.constant 0 : index
    %c0_2 = arith.constant 0 : index
    %1 = vector.load %arg2[%c0_1, %c0_2] : memref<16x272xf32, #tpu.memory_space<vmem>>, vector<16x272xf32>
    %cst = arith.constant dense<0.000000e+00> : vector<8x272xf32>
    %2 = tpu.matmul %0, %1, %cst {dimension_numbers = #tpu.dot_dimension_numbers<[1], [0], [0], [1], [0, 0, 1, 1], [], []>} : vector<8x16xf32>, vector<16x272xf32>, vector<8x272xf32> -> vector<8x272xf32>
    %c0_3 = arith.constant 0 : index
    %c0_4 = arith.constant 0 : index
    %3 = vector.load %arg5[%c0_3, %c0_4] : memref<16x8xbf16, #tpu.memory_space<vmem>>, vector<16x8xbf16>
    %4 = arith.extf %3 : vector<16x8xbf16> to vector<16x8xf32>
    %c0_5 = arith.constant 0 : index
    %c0_6 = arith.constant 0 : index
    %5 = vector.load %arg6[%c0_5, %c0_6] : memref<16x8xbf16, #tpu.memory_space<vmem>>, vector<16x8xbf16>
    %6 = arith.extf %5 : vector<16x8xbf16> to vector<16x8xf32>
    %c0_7 = arith.constant 0 : index
    %c0_8 = arith.constant 0 : index
    %7 = vector.load %arg7[%c0_7, %c0_8] : memref<8x16xbf16, #tpu.memory_space<vmem>>, vector<8x16xbf16>
    %8 = arith.extf %7 : vector<8x16xbf16> to vector<8x16xf32>
    %9 = vector.extract_strided_slice %2 {offsets = [0, 0], sizes = [8, 264], strides = [1, 1]} : vector<8x272xf32> to vector<8x264xf32>
    %cst_9 = arith.constant dense<0.000000e+00> : vector<16x264xf32>
    %10 = tpu.matmul %4, %9, %cst_9 {dimension_numbers = #tpu.dot_dimension_numbers<[1], [0], [0], [1], [0, 0, 1, 1], [], []>} : vector<16x8xf32>, vector<8x264xf32>, vector<16x264xf32> -> vector<16x264xf32>
    %11 = vector.extract_strided_slice %2 {offsets = [0, 264], sizes = [8, 8], strides = [1, 1]} : vector<8x272xf32> to vector<8x8xf32>
    %cst_10 = arith.constant dense<0.000000e+00> : vector<16x8xf32>
    %12 = tpu.matmul %6, %11, %cst_10 {dimension_numbers = #tpu.dot_dimension_numbers<[1], [0], [0], [1], [0, 0, 1, 1], [], []>} : vector<16x8xf32>, vector<8x8xf32>, vector<16x8xf32> -> vector<16x8xf32>
    %13 = vector.extract_strided_slice %10 {offsets = [0, 0], sizes = [16, 128], strides = [1, 1]} : vector<16x264xf32> to vector<16x128xf32>
    %14 = vector.extract_strided_slice %10 {offsets = [0, 128], sizes = [16, 128], strides = [1, 1]} : vector<16x264xf32> to vector<16x128xf32>
    %15 = vector.extract_strided_slice %10 {offsets = [0, 256], sizes = [16, 4], strides = [1, 1]} : vector<16x264xf32> to vector<16x4xf32>
    %16 = vector.extract_strided_slice %10 {offsets = [0, 260], sizes = [16, 4], strides = [1, 1]} : vector<16x264xf32> to vector<16x4xf32>
    %17 = vector.extract_strided_slice %12 {offsets = [0, 0], sizes = [16, 4], strides = [1, 1]} : vector<16x8xf32> to vector<16x4xf32>
    %18 = vector.extract_strided_slice %12 {offsets = [0, 4], sizes = [16, 4], strides = [1, 1]} : vector<16x8xf32> to vector<16x4xf32>
    %19 = arith.addf %15, %17 : vector<16x4xf32>
    %20 = arith.addf %16, %18 : vector<16x4xf32>
    %cst_11 = arith.constant 0.000000e+00 : f32
    %21 = vector.broadcast %cst_11 : f32 to vector<16x4xf32>
    %22 = arith.cmpf ogt, %19, %21 : vector<16x4xf32>
    %cst_12 = arith.constant 0.00999999977 : f32
    %23 = vector.broadcast %cst_12 : f32 to vector<16x4xf32>
    %24 = arith.mulf %23, %19 : vector<16x4xf32>
    %25 = arith.select %22, %19, %24 : vector<16x4xi1>, vector<16x4xf32>
    %cst_13 = arith.constant 0.000000e+00 : f32
    %26 = vector.broadcast %cst_13 : f32 to vector<16x4xf32>
    %27 = arith.cmpf ogt, %20, %26 : vector<16x4xf32>
    %cst_14 = arith.constant 0.00999999977 : f32
    %28 = vector.broadcast %cst_14 : f32 to vector<16x4xf32>
    %29 = arith.mulf %28, %20 : vector<16x4xf32>
    %30 = arith.select %27, %20, %29 : vector<16x4xi1>, vector<16x4xf32>
    %c0_15 = arith.constant 0 : index
    %c0_16 = arith.constant 0 : index
    %31 = vector.load %arg3[%c0_15, %c0_16] : memref<16x1xf32, #tpu.memory_space<vmem>>, vector<16x1xf32>
    %c0_17 = arith.constant 0 : index
    %c0_18 = arith.constant 0 : index
    %32 = vector.load %arg4[%c0_17, %c0_18] : memref<16x1xf32, #tpu.memory_space<vmem>>, vector<16x1xf32>
    %33 = vector.broadcast %31 : vector<16x1xf32> to vector<16x4xf32>
    %34 = arith.mulf %33, %25 : vector<16x4xf32>
    %35 = vector.broadcast %32 : vector<16x1xf32> to vector<16x4xf32>
    %36 = arith.mulf %35, %30 : vector<16x4xf32>
    %37 = arith.addf %34, %36 : vector<16x4xf32>
    %38 = vector.broadcast %31 : vector<16x1xf32> to vector<16x128xf32>
    %39 = arith.mulf %38, %13 : vector<16x128xf32>
    %40 = vector.broadcast %32 : vector<16x1xf32> to vector<16x128xf32>
    %41 = arith.mulf %40, %14 : vector<16x128xf32>
    %42 = arith.addf %39, %41 : vector<16x128xf32>
    %cst_19 = arith.constant dense<0xFF800000> : vector<4xf32>
    %43 = vector.multi_reduction <maximumf>, %37, %cst_19 [0] : vector<16x4xf32> to vector<4xf32>
    %44 = vector.shape_cast %43 : vector<4xf32> to vector<1x4xf32>
    %45 = vector.broadcast %44 : vector<1x4xf32> to vector<16x4xf32>
    %46 = arith.subf %37, %45 : vector<16x4xf32>
    %47 = math.exp %46 : vector<16x4xf32>
    %c0_20 = arith.constant 0 : index
    %c0_21 = arith.constant 0 : index
    %48 = vector.load %arg8[%c0_20, %c0_21] : memref<4x128xf32, #tpu.memory_space<vmem>>, vector<4x128xf32>
    %cst_22 = arith.constant dense<0.000000e+00> : vector<16x128xf32>
    %49 = tpu.matmul %47, %48, %cst_22 {dimension_numbers = #tpu.dot_dimension_numbers<[1], [0], [0], [1], [0, 0, 1, 1], [], []>} : vector<16x4xf32>, vector<4x128xf32>, vector<16x128xf32> -> vector<16x128xf32>
    %50 = arith.mulf %49, %42 : vector<16x128xf32>
    %51 = tpu.concatenate %50, %49 in 1 : vector<16x128xf32>, vector<16x128xf32> -> vector<16x256xf32>
    %cst_23 = arith.constant dense<0.000000e+00> : vector<8x256xf32>
    %52 = tpu.matmul %8, %51, %cst_23 {dimension_numbers = #tpu.dot_dimension_numbers<[1], [0], [0], [1], [0, 0, 1, 1], [], []>} : vector<8x16xf32>, vector<16x256xf32>, vector<8x256xf32> -> vector<8x256xf32>
    %53 = vector.extract_strided_slice %52 {offsets = [0, 0], sizes = [8, 128], strides = [1, 1]} : vector<8x256xf32> to vector<8x128xf32>
    %54 = vector.extract_strided_slice %52 {offsets = [0, 128], sizes = [8, 128], strides = [1, 1]} : vector<8x256xf32> to vector<8x128xf32>
    %cst_24 = arith.constant 0.000000e+00 : f32
    %55 = vector.broadcast %cst_24 : f32 to vector<8x128xf32>
    %56 = arith.cmpf ogt, %54, %55 : vector<8x128xf32>
    %cst_25 = arith.constant 1.000000e+00 : f32
    %57 = vector.broadcast %cst_25 : f32 to vector<8x128xf32>
    %58 = arith.select %56, %54, %57 : vector<8x128xi1>, vector<8x128xf32>
    %59 = tpu.reciprocal %58 : vector<8x128xf32> -> vector<8x128xf32>
    %60 = arith.mulf %53, %59 : vector<8x128xf32>
    %c0_26 = arith.constant 0 : index
    %c0_27 = arith.constant 0 : index
    %61 = vector.load %arg9[%c0_26, %c0_27] : memref<8x128xf32, #tpu.memory_space<vmem>>, vector<8x128xf32>
    tpu.vector_store %arg9[%c0_26, %c0_27], %60 {strides = array<i32>} : memref<8x128xf32, #tpu.memory_space<vmem>>, vector<8x128xf32>,
    return
  }
  func.func @transform_0(%arg0: i32) -> (i32, i32) {
    %c0_i32 = arith.constant 0 : i32
    %c0_i32_0 = arith.constant 0 : i32
    %c0_i32_1 = arith.constant 0 : i32
    return %c0_i32, %c0_i32_0 : i32, i32
  }
  func.func @transform_1(%arg0: i32) -> (i32, i32) {
    %c0_i32 = arith.constant 0 : i32
    %c0_i32_0 = arith.constant 0 : i32
    %c0_i32_1 = arith.constant 0 : i32
    return %c0_i32, %c0_i32_0 : i32, i32
  }
  func.func @transform_2(%arg0: i32) -> (i32, i32) {
    %c0_i32 = arith.constant 0 : i32
    %c0_i32_0 = arith.constant 0 : i32
    %c0_i32_1 = arith.constant 0 : i32
    return %c0_i32, %c0_i32_0 : i32, i32
  }
  func.func @transform_3(%arg0: i32) -> (i32, i32) {
    %c0_i32 = arith.constant 0 : i32
    %c0_i32_0 = arith.constant 0 : i32
    %c0_i32_1 = arith.constant 0 : i32
    return %c0_i32, %c0_i32_0 : i32, i32
  }
  func.func @transform_4(%arg0: i32) -> (i32, i32) {
    %c0_i32 = arith.constant 0 : i32
    %c0_i32_0 = arith.constant 0 : i32
    %c0_i32_1 = arith.constant 0 : i32
    return %c0_i32, %c0_i32_0 : i32, i32
  }
  func.func @transform_5(%arg0: i32) -> (i32, i32) {
    %c0_i32 = arith.constant 0 : i32
    %c0_i32_0 = arith.constant 0 : i32
    %c0_i32_1 = arith.constant 0 : i32
    return %c0_i32, %c0_i32_0 : i32, i32
  }
  func.func @transform_6(%arg0: i32) -> (i32, i32) {
    %c0_i32 = arith.constant 0 : i32
    %c0_i32_0 = arith.constant 0 : i32
    %c0_i32_1 = arith.constant 0 : i32
    return %c0_i32, %c0_i32_0 : i32, i32
  }
  func.func @transform_7(%arg0: i32) -> (i32, i32) {
    %c0_i32 = arith.constant 0 : i32
    %c0_i32_0 = arith.constant 0 : i32
    %c0_i32_1 = arith.constant 0 : i32
    return %c0_i32, %c0_i32_0 : i32, i32
  }
  func.func @transform_8(%arg0: i32) -> (i32, i32) {
    %c0_i32 = arith.constant 0 : i32
    %c0_i32_0 = arith.constant 0 : i32
    %c0_i32_1 = arith.constant 0 : i32
    return %c0_i32, %c0_i32_0 : i32, i32
  }
}

</mosaic_0001>

<llo_original>
// kernel: tpu_custom_call.1
$region0: #{tpu_custom_call.1}
  #allocation0 [shape = 'u32[]', space=smem, size = 0x4, offset = 0x4, fixed_abs, tag = 'smem constant byte address 0x4 - core index']
  #allocation1 [shape = 'u32[72,128]{1,0:T(1,128)}', space=vmem, size = 0x9000, scoped, tag = 'internal scratch']
  %s0 = inlined_call_operand.vmem [shape: f32[8,16], index: 0, kind: input, shape index: {}]
  %s1 = inlined_call_operand.hbm [shape: f32[16,272], index: 1, kind: input, shape index: {}]
  %s2 = inlined_call_operand.vmem [shape: f32[16,1], index: 2, kind: input, shape index: {}]
  %s3 = inlined_call_operand.vmem [shape: f32[16,1], index: 3, kind: input, shape index: {}]
  %s4 = inlined_call_operand.vmem [shape: bf16[16,8], index: 4, kind: input, shape index: {}]
  %s5 = inlined_call_operand.vmem [shape: bf16[16,8], index: 5, kind: input, shape index: {}]
  %s6 = inlined_call_operand.vmem [shape: bf16[8,16], index: 6, kind: input, shape index: {}]
  %s7 = inlined_call_operand.vmem [shape: f32[4,128], index: 7, kind: input, shape index: {}]
  %s8 = inlined_call_operand.hbm [shape: f32[8,128], index: 8, kind: output, shape index: {}]
  %s9 = sld [smem:[#allocation0]]
  $region46: #{tpu_custom_call.1} parent=0
    _
  %s11 = ssub.s32 1, %s9
  %s12 = scalar_select 0, %s11, %s9
  $region1: #{tpu_custom_call.1} parent=0
    #allocation2 [shape = 'u8[24576]{0}', space=vmem, size = 0x6000, scoped, tag = 'input window, operand 1, single buffered']
    #allocation3 [shape = 's32[1]{0}', space=sflag, size = 0x4, scoped, tag = 'scoped memory for tpu_custom_call.1']
    #allocation4 [shape = 's32[1]{0}', space=sflag, size = 0x4, scoped, tag = 'scoped memory for tpu_custom_call.1']
    #allocation5 [shape = 'u8[4096]{0}', space=vmem, size = 0x1000, scoped, tag = 'output window, operand 0, single buffered']
    %13 = vsyncpa [#allocation3], 0
    %14 = vsyncpa [#allocation4], 0
    // Predicated region
    $region2: #{tpu_custom_call.1} parent=1 // pred_check
      _
    $region3: #{tpu_custom_call.1} parent=1 // pred_check_branch
      %16 = sbr.rel (0) target = $region5
    $region4: #{tpu_custom_call.1} parent=1 // pred_region
      _
    $region5: #{tpu_custom_call.1} parent=1 // pred_fallthru
      _
    // Predicated region
    $region6: #{tpu_custom_call.1} parent=1 // pred_check
      _
    $region7: #{tpu_custom_call.1} parent=1 // pred_check_branch
      %18 = sbr.rel (0) target = $region9
    $region8: #{tpu_custom_call.1} parent=1 // pred_region
      %20 = vsyncadd [#allocation3], 0
      %s21 = sshll.u32 %s1, 4
      %s22 = int_to_ptr.hbm [resolvable:$true] %s21
      %s23 = sshll.u32 [#allocation2], 4
      %s24 = int_to_ptr.vmem [resolvable:$true] %s23
      %29 = dma.hbm_to_vmem [thread:$0]  %s22, 768, %s24, [#allocation3], 384, 384, 24
    $region9: #{tpu_custom_call.1} parent=1 // pred_fallthru
      _
    // Predicated region
    $region10: #{tpu_custom_call.1} parent=1 // pred_check
      _
    $region11: #{tpu_custom_call.1} parent=1 // pred_check_branch
      %31 = sbr.rel (0) target = $region13
    $region12: #{tpu_custom_call.1} parent=1 // pred_region
      _
    $region13: #{tpu_custom_call.1} parent=1 // pred_fallthru
      _
    // Predicated region
    $region14: #{tpu_custom_call.1} parent=1 // pred_check
      _
    $region15: #{tpu_custom_call.1} parent=1 // pred_check_branch
      %33 = sbr.rel (0) target = $region17
    $region16: #{tpu_custom_call.1} parent=1 // pred_region
      _
    $region17: #{tpu_custom_call.1} parent=1 // pred_fallthru
      _
    // Predicated region
    $region18: #{tpu_custom_call.1} parent=1 // pred_check
      _
    $region19: #{tpu_custom_call.1} parent=1 // pred_check_branch
      %35 = sbr.rel (0) target = $region21
    $region20: #{tpu_custom_call.1} parent=1 // pred_region
      _
    $region21: #{tpu_custom_call.1} parent=1 // pred_fallthru
      _
    // Predicated region
    $region22: #{tpu_custom_call.1} parent=1 // pred_check
      _
    $region23: #{tpu_custom_call.1} parent=1 // pred_check_branch
      %37 = sbr.rel (0) target = $region25
    $region24: #{tpu_custom_call.1} parent=1 // pred_region
      _
    $region25: #{tpu_custom_call.1} parent=1 // pred_fallthru
      _
    // Predicated region
    $region26: #{tpu_custom_call.1} parent=1 // pred_check
      _
    $region27: #{tpu_custom_call.1} parent=1 // pred_check_branch
      %39 = sbr.rel (0) target = $region29
    $region28: #{tpu_custom_call.1} parent=1 // pred_region
      _
    $region29: #{tpu_custom_call.1} parent=1 // pred_fallthru
      _
    // Predicated region
    $region30: #{tpu_custom_call.1} parent=1 // pred_check
      _
    $region31: #{tpu_custom_call.1} parent=1 // pred_check_branch
      %41 = sbr.rel (0) target = $region33
    $region32: #{tpu_custom_call.1} parent=1 // pred_region
      _
    $region33: #{tpu_custom_call.1} parent=1 // pred_fallthru
      _
    // Predicated region
    $region34: #{tpu_custom_call.1} parent=1 // pred_check
      _
    $region35: #{tpu_custom_call.1} parent=1 // pred_check_branch
      %43 = sbr.rel (0) target = $region37
    $region36: #{tpu_custom_call.1} parent=1 // pred_region
      %45 = dma.done [#allocation3], 768
    $region37: #{tpu_custom_call.1} parent=1 // pred_fallthru
      _
    %v46 = vld [vmem:[%s0] sm:$0xff]
    %v47 = vld [vmem:[#allocation2] sm:$0xff]
    %v48 = vld [vmem:[#allocation2 + $0x8] sm:$0xff]
    %v49 = vld [vmem:[#allocation2 + $0x10] sm:$0xff]
    %v50 = vld [vmem:[#allocation2 + $0x18] sm:$0xff]
    %v51 = vld [vmem:[#allocation2 + $0x20] sm:$0xff]
    %v52 = vld [vmem:[#allocation2 + $0x28] sm:$0xff]
    %vm53 = vcmask 130048
    %v55 = vsel %vm53, %v46, 0
    %57 = vmatpush.msra.mxu0 0.0
    %58 = vmatpush.msra.mxu0 0.0
    %59 = vmatpush.msra.mxu0 0.0
    %60 = vmatpush.msra.mxu0 0.0
    %61 = vmatpush.msra.mxu0 0.0
    %62 = vmatpush.msra.mxu0 0.0
    %63 = vmatpush.msra.mxu0 0.0
    %64 = vmatpush.msra.mxu0 0.0
    %65 = vmatpush.msra.mxu0 0.0
    %66 = vmatpush.msra.mxu0 0.0
    %67 = vmatpush.msra.mxu0 0.0
    %68 = vmatpush.msra.mxu0 0.0
    %69 = vmatpush.msra.mxu0 0.0
    %70 = vmatpush.msra.mxu0 0.0
    %71 = vmatpush.msra.mxu0 %v50
    %72 = vmatpush.msra.mxu0 %v47
    %73 = vmatmul.f32.gmra.mxu0 %v55
    %v74 = vpop.f32.mrf.mxu0
    %v75 = vadd.f32 0.0, %v74
    %76 = vdwg.mxu0
    %77 = vmatpush.msra.mxu0 0.0
    %78 = vmatpush.msra.mxu0 0.0
    %79 = vmatpush.msra.mxu0 0.0
    %80 = vmatpush.msra.mxu0 0.0
    %81 = vmatpush.msra.mxu0 0.0
    %82 = vmatpush.msra.mxu0 0.0
    %83 = vmatpush.msra.mxu0 0.0
    %84 = vmatpush.msra.mxu0 0.0
    %85 = vmatpush.msra.mxu0 0.0
    %86 = vmatpush.msra.mxu0 0.0
    %87 = vmatpush.msra.mxu0 0.0
    %88 = vmatpush.msra.mxu0 0.0
    %89 = vmatpush.msra.mxu0 0.0
    %90 = vmatpush.msra.mxu0 0.0
    %91 = vmatpush.msra.mxu0 %v51
    %92 = vmatpush.msra.mxu0 %v48
    %93 = vmatmul.f32.gmra.mxu0 %v55
    %v94 = vpop.f32.mrf.mxu0
    %v95 = vadd.f32 0.0, %v94
    %96 = vdwg.mxu0
    %97 = vmatpush.msra.mxu0 0.0
    %98 = vmatpush.msra.mxu0 0.0
    %99 = vmatpush.msra.mxu0 0.0
    %100 = vmatpush.msra.mxu0 0.0
    %101 = vmatpush.msra.mxu0 0.0
    %102 = vmatpush.msra.mxu0 0.0
    %103 = vmatpush.msra.mxu0 0.0
    %104 = vmatpush.msra.mxu0 0.0
    %105 = vmatpush.msra.mxu0 0.0
    %106 = vmatpush.msra.mxu0 0.0
    %107 = vmatpush.msra.mxu0 0.0
    %108 = vmatpush.msra.mxu0 0.0
    %109 = vmatpush.msra.mxu0 0.0
    %110 = vmatpush.msra.mxu0 0.0
    %111 = vmatpush.msra.mxu0 %v52
    %112 = vmatpush.msra.mxu0 %v49
    %113 = vmatmul.f32.gmra.mxu0 %v55
    %v114 = vpop.f32.mrf.mxu0
    %v115 = vadd.f32 0.0, %v114
    %116 = vdwg.mxu0
    %v117 = vld [vmem:[%s4] sm:$0xf]
    %v118 = vld [vmem:[%s4 + $0x4] sm:$0xf]
    %v119 = vunpack.c.l.bf16 %v117
    %v120 = vunpack.c.l.bf16 %v118
    %v121 = vld [vmem:[%s5] sm:$0xf]
    %v122 = vld [vmem:[%s5 + $0x4] sm:$0xf]
    %v123 = vunpack.c.l.bf16 %v121
    %v124 = vunpack.c.l.bf16 %v122
    %v125 = vld [vmem:[%s6] sm:$0xf]
    %v126 = vunpack.c.l.bf16 %v125
    %vm127 = vcmask 64512
    %v129 = vsel %vm127, %v119, 0
    %v132 = vsel %vm127, %v120, 0
    %134 = vmatpush.msra.mxu0 0.0
    %135 = vmatpush.msra.mxu0 0.0
    %136 = vmatpush.msra.mxu0 0.0
    %137 = vmatpush.msra.mxu0 0.0
    %138 = vmatpush.msra.mxu0 0.0
    %139 = vmatpush.msra.mxu0 0.0
    %140 = vmatpush.msra.mxu0 0.0
    %141 = vmatpush.msra.mxu0 0.0
    %142 = vmatpush.msra.mxu0 0.0
    %143 = vmatpush.msra.mxu0 0.0
    %144 = vmatpush.msra.mxu0 0.0
    %145 = vmatpush.msra.mxu0 0.0
    %146 = vmatpush.msra.mxu0 0.0
    %147 = vmatpush.msra.mxu0 0.0
    %148 = vmatpush.msra.mxu0 0.0
    %149 = vmatpush.msra.mxu0 %v75
    %150 = vmatmul.f32.gmra.mxu0 %v129
    %v151 = vpop.f32.mrf.mxu0
    %v152 = vadd.f32 0.0, %v151
    %153 = vmatmul.f32.gmra.mxu0 %v132
    %v154 = vpop.f32.mrf.mxu0
    %v155 = vadd.f32 0.0, %v154
    %156 = vdwg.mxu0
    %157 = vmatpush.msra.mxu0 0.0
    %158 = vmatpush.msra.mxu0 0.0
    %159 = vmatpush.msra.mxu0 0.0
    %160 = vmatpush.msra.mxu0 0.0
    %161 = vmatpush.msra.mxu0 0.0
    %162 = vmatpush.msra.mxu0 0.0
    %163 = vmatpush.msra.mxu0 0.0
    %164 = vmatpush.msra.mxu0 0.0
    %165 = vmatpush.msra.mxu0 0.0
    %166 = vmatpush.msra.mxu0 0.0
    %167 = vmatpush.msra.mxu0 0.0
    %168 = vmatpush.msra.mxu0 0.0
    %169 = vmatpush.msra.mxu0 0.0
    %170 = vmatpush.msra.mxu0 0.0
    %171 = vmatpush.msra.mxu0 0.0
    %172 = vmatpush.msra.mxu0 %v95
    %173 = vmatmul.f32.gmra.mxu0 %v129
    %v174 = vpop.f32.mrf.mxu0
    %v175 = vadd.f32 0.0, %v174
    %176 = vmatmul.f32.gmra.mxu0 %v132
    %v177 = vpop.f32.mrf.mxu0
    %v178 = vadd.f32 0.0, %v177
    %179 = vdwg.mxu0
    %180 = vmatpush.msra.mxu0 0.0
    %181 = vmatpush.msra.mxu0 0.0
    %182 = vmatpush.msra.mxu0 0.0
    %183 = vmatpush.msra.mxu0 0.0
    %184 = vmatpush.msra.mxu0 0.0
    %185 = vmatpush.msra.mxu0 0.0
    %186 = vmatpush.msra.mxu0 0.0
    %187 = vmatpush.msra.mxu0 0.0
    %188 = vmatpush.msra.mxu0 0.0
    %189 = vmatpush.msra.mxu0 0.0
    %190 = vmatpush.msra.mxu0 0.0
    %191 = vmatpush.msra.mxu0 0.0
    %192 = vmatpush.msra.mxu0 0.0
    %193 = vmatpush.msra.mxu0 0.0
    %194 = vmatpush.msra.mxu0 0.0
    %195 = vmatpush.msra.mxu0 %v115
    %196 = vmatmul.f32.gmra.mxu0 %v129
    %v197 = vpop.f32.mrf.mxu0
    %v198 = vadd.f32 0.0, %v197
    %199 = vmatmul.f32.gmra.mxu0 %v132
    %v200 = vpop.f32.mrf.mxu0
    %v201 = vadd.f32 0.0, %v200
    %202 = vdwg.mxu0
    %204 = vrot.lane.b32.xlu0 %v115, 120
    %v205 = vpop.permute.xlu0 %204
    %v208 = vsel %vm127, %v123, 0
    %v211 = vsel %vm127, %v124, 0
    %213 = vmatpush.msra.mxu0 0.0
    %214 = vmatpush.msra.mxu0 0.0
    %215 = vmatpush.msra.mxu0 0.0
    %216 = vmatpush.msra.mxu0 0.0
    %217 = vmatpush.msra.mxu0 0.0
    %218 = vmatpush.msra.mxu0 0.0
    %219 = vmatpush.msra.mxu0 0.0
    %220 = vmatpush.msra.mxu0 0.0
    %221 = vmatpush.msra.mxu0 0.0
    %222 = vmatpush.msra.mxu0 0.0
    %223 = vmatpush.msra.mxu0 0.0
    %224 = vmatpush.msra.mxu0 0.0
    %225 = vmatpush.msra.mxu0 0.0
    %226 = vmatpush.msra.mxu0 0.0
    %227 = vmatpush.msra.mxu0 0.0
    %228 = vmatpush.msra.mxu0 %v205
    %229 = vmatmul.f32.gmra.mxu0 %v208
    %v230 = vpop.f32.mrf.mxu0
    %v231 = vadd.f32 0.0, %v230
    %232 = vmatmul.f32.gmra.mxu0 %v211
    %v233 = vpop.f32.mrf.mxu0
    %v234 = vadd.f32 0.0, %v233
    %235 = vdwg.mxu0
    %v236 = vadd.f32 %v198, %v231
    %v237 = vadd.f32 %v201, %v234
    %vm238 = vcmp.gt.f32.partialorder %v236, 0.0
    %vm239 = vcmp.gt.f32.partialorder %v237, 0.0
    %v240 = vmul.f32 %v236, 0.01
    %v241 = vmul.f32 %v237, 0.01
    %v242 = vsel %vm238, %v236, %v240
    %v243 = vsel %vm239, %v237, %v241
    %v244 = vld [vmem:[%s2] sm:$0xff]
    %v245 = vld [vmem:[%s2 + $0x8] sm:$0xff]
    %v246 = vld [vmem:[%s3] sm:$0xff]
    %v247 = vld [vmem:[%s3 + $0x8] sm:$0xff]
    %249 = vset.pattern.permute.xlu0 0
    %250 = vperm.xlu0 %249, %v244
    %v251 = vpop.permute.xlu0 %250
    %254 = vset.pattern.permute.xlu0 0
    %255 = vperm.xlu0 %254, %v245
    %v256 = vpop.permute.xlu0 %255
    %v258 = vmul.f32 %v251, %v242
    %v259 = vmul.f32 %v256, %v243
    %261 = vset.pattern.permute.xlu0 0
    %262 = vperm.xlu0 %261, %v246
    %v263 = vpop.permute.xlu0 %262
    %266 = vset.pattern.permute.xlu0 0
    %267 = vperm.xlu0 %266, %v247
    %v268 = vpop.permute.xlu0 %267
    %v270 = vmul.f32 %v263, %v242
    %v271 = vmul.f32 %v268, %v243
    %274 = vrot.lane.b32.xlu0 %v270, 124
    %v275 = vpop.permute.xlu0 %274
    %276 = vrot.lane.b32.xlu0 %v271, 124
    %v277 = vpop.permute.xlu0 %276
    %v280 = vadd.f32 %v258, %v275
    %v281 = vadd.f32 %v259, %v277
    %v282 = vmul.f32 %v251, %v152
    %v283 = vmul.f32 %v256, %v155
    %v284 = vmul.f32 %v263, %v175
    %v285 = vmul.f32 %v268, %v178
    %v286 = vadd.f32 %v282, %v284
    %v287 = vadd.f32 %v283, %v285
    %vm288 = vcmask 31744
    %v289 = vsel %vm288, %v280, -inf
    %v290 = vsel %vm288, %v281, -inf
    %v291 = vmax.f32 %v289, %v290
    %v292 = vrot.slane %v291, 4
    %v293 = vmax.f32 %v291, %v292
    %v294 = vrot.slane %v293, 2
    %v295 = vmax.f32 %v293, %v294
    %v296 = vrot.slane %v295, 1
    %v297 = vmax.f32 %v295, %v296
    %v298 = vsub.f32 %v280, %v297
    %v299 = vsub.f32 %v281, %v297
    %v300 = vmul.f32 %v298, 1.442695
    %v301 = vpow.pop %v300
    %v302 = vmul.f32 %v299, 1.442695
    %v303 = vpow.pop %v302
    %v304 = vld [vmem:[%s7] sm:$0xf]
    %v306 = vsel %vm288, %v301, 0
    %v309 = vsel %vm288, %v303, 0
    %vm311 = vcmask 1043456
    %v313 = vsel %vm311, %v304, 0
    %315 = vmatpush.msra.mxu0 0.0
    %316 = vmatpush.msra.mxu0 0.0
    %317 = vmatpush.msra.mxu0 0.0
    %318 = vmatpush.msra.mxu0 0.0
    %319 = vmatpush.msra.mxu0 0.0
    %320 = vmatpush.msra.mxu0 0.0
    %321 = vmatpush.msra.mxu0 0.0
    %322 = vmatpush.msra.mxu0 0.0
    %323 = vmatpush.msra.mxu0 0.0
    %324 = vmatpush.msra.mxu0 0.0
    %325 = vmatpush.msra.mxu0 0.0
    %326 = vmatpush.msra.mxu0 0.0
    %327 = vmatpush.msra.mxu0 0.0
    %328 = vmatpush.msra.mxu0 0.0
    %329 = vmatpush.msra.mxu0 0.0
    %330 = vmatpush.msra.mxu0 %v313
    %331 = vmatmul.f32.gmra.mxu0 %v306
    %v332 = vpop.f32.mrf.mxu0
    %v333 = vadd.f32 0.0, %v332
    %334 = vmatmul.f32.gmra.mxu0 %v309
    %v335 = vpop.f32.mrf.mxu0
    %v336 = vadd.f32 0.0, %v335
    %337 = vdwg.mxu0
    %v338 = vmul.f32 %v333, %v286
    %v339 = vmul.f32 %v336, %v287
    %v341 = vsel %vm53, %v126, 0
    %343 = vmatpush.msra.mxu0 0.0
    %344 = vmatpush.msra.mxu0 0.0
    %345 = vmatpush.msra.mxu0 0.0
    %346 = vmatpush.msra.mxu0 0.0
    %347 = vmatpush.msra.mxu0 0.0
    %348 = vmatpush.msra.mxu0 0.0
    %349 = vmatpush.msra.mxu0 0.0
    %350 = vmatpush.msra.mxu0 0.0
    %351 = vmatpush.msra.mxu0 0.0
    %352 = vmatpush.msra.mxu0 0.0
    %353 = vmatpush.msra.mxu0 0.0
    %354 = vmatpush.msra.mxu0 0.0
    %355 = vmatpush.msra.mxu0 0.0
    %356 = vmatpush.msra.mxu0 0.0
    %357 = vmatpush.msra.mxu0 %v339
    %358 = vmatpush.msra.mxu0 %v338
    %359 = vmatmul.f32.gmra.mxu0 %v341
    %v360 = vpop.f32.mrf.mxu0
    %v361 = vadd.f32 0.0, %v360
    %362 = vdwg.mxu0
    %363 = vmatpush.msra.mxu0 0.0
    %364 = vmatpush.msra.mxu0 0.0
    %365 = vmatpush.msra.mxu0 0.0
    %366 = vmatpush.msra.mxu0 0.0
    %367 = vmatpush.msra.mxu0 0.0
    %368 = vmatpush.msra.mxu0 0.0
    %369 = vmatpush.msra.mxu0 0.0
    %370 = vmatpush.msra.mxu0 0.0
    %371 = vmatpush.msra.mxu0 0.0
    %372 = vmatpush.msra.mxu0 0.0
    %373 = vmatpush.msra.mxu0 0.0
    %374 = vmatpush.msra.mxu0 0.0
    %375 = vmatpush.msra.mxu0 0.0
    %376 = vmatpush.msra.mxu0 0.0
    %377 = vmatpush.msra.mxu0 %v336
    %378 = vmatpush.msra.mxu0 %v333
    %379 = vmatmul.f32.gmra.mxu0 %v341
    %v380 = vpop.f32.mrf.mxu0
    %v381 = vadd.f32 0.0, %v380
    %382 = vdwg.mxu0
    %vm383 = vcmp.gt.f32.partialorder %v381, 0.0
    %v384 = vsel %vm383, %v381, 1.0
    %v385 = vrcp.pop %v384
    %v386 = vmul.f32 %v384, %v385
    %v387 = vsub.f32 1.0, %v386
    %v388 = vmul.f32 %v385, %v387
    %v389 = vadd.f32 %v385, %v388
    %vm390 = vweird.f32 %v384
    %vm391 = vweird.f32 %v385
    %vm392 = vmor %vm390, %vm391
    %v393 = vsel %vm392, %v385, %v389
    %v394 = vand.u32 2147483647, %v384
    %vm395 = vcmp.eq.f32.partialorder %v394, 8.507059e+37
    %v396 = vand.u32 %v384, 2147483648
    %v397 = vor.u32 1.1754944e-38, %v396
    %v398 = vsel %vm395, %v397, %v393
    %v399 = vmul.f32 %v361, %v398
    %400 = vst [vmem:[#allocation5] sm:$0xff] %v399
    // Predicated region
    $region38: #{tpu_custom_call.1} parent=1 // pred_check
      _
    $region39: #{tpu_custom_call.1} parent=1 // pred_check_branch
      %402 = sbr.rel (0) target = $region41
    $region40: #{tpu_custom_call.1} parent=1 // pred_region
      %404 = vsyncadd [#allocation4], 0
      %s406 = sshll.u32 [#allocation5], 4
      %s407 = int_to_ptr.vmem [resolvable:$true] %s406
      %s408 = sshll.u32 %s8, 4
      %s409 = int_to_ptr.hbm [resolvable:$true] %s408
      %411 = dma.vmem_to_hbm [thread:$0]  %s407, 128, %s409, [#allocation4]
    $region41: #{tpu_custom_call.1} parent=1 // pred_fallthru
      _
    // Predicated region
    $region42: #{tpu_custom_call.1} parent=1 // pred_check
      _
    $region43: #{tpu_custom_call.1} parent=1 // pred_check_branch
      %413 = sbr.rel (0) target = $region45
    $region44: #{tpu_custom_call.1} parent=1 // pred_region
      %415 = dma.done [#allocation4], 128
    $region45: #{tpu_custom_call.1} parent=1 // pred_fallthru
      _
    %416 = vsyncpa [#allocation3], 1
    %417 = vsyncpa [#allocation4], 1

</llo_original>
